<compile_context>
chip_gen: v6e
topology: v6e:2x2x1
jax: 0.10.0
libtpu: 0.0.40
codegen_flags: <defaults>
</compile_context>

<pallas_src>
import functools
import math

import jax
import jax.numpy as jnp
from jax.experimental import pallas as pl
from jax.experimental.pallas import tpu as pltpu


def _round_up(x, m):
    return (x + m - 1) // m * m


# ------------------------------ kernels ------------------------------------


def _noisy_linear_train_kernel(x_ref, mu_wT_ref, sig_wT_ref,
                               mu_b_ref, sig_b_ref, eps_i_ref, eps_j_ref,
                               o_ref, *, tk, tn):
    # grid = (batch tiles, num_out tiles, num_in tiles); reduction axis last.
    j = pl.program_id(1)
    k = pl.program_id(2)

    @pl.when(k == 0)
    def _():
        o_ref[...] = jnp.zeros_like(o_ref)

    k_off = pl.multiple_of(k * tk, 128)
    j_off = pl.multiple_of(j * tn, 128)
    eps_i = eps_i_ref[:, pl.ds(k_off, tk)]        # (1, tk) f32, resident vector
    eps_j = eps_j_ref[:, pl.ds(j_off, tn)]        # (1, tn) f32, resident vector

    x = x_ref[...]                                # (tb, tk) f32
    xb = x.astype(mu_wT_ref.dtype)                # bf16 for the MXU
    xe = (x * eps_i).astype(sig_wT_ref.dtype)     # product in f32, then bf16

    # y = x @ mu_W^T + ((x * eps_i) @ sig_W^T) * eps_j  (W never materialized).
    o_ref[...] += (
        jnp.dot(xb, mu_wT_ref[...], preferred_element_type=jnp.float32)
        + jnp.dot(xe, sig_wT_ref[...], preferred_element_type=jnp.float32) * eps_j
    )

    @pl.when(k == pl.num_programs(2) - 1)
    def _():
        bias = (mu_b_ref[:, pl.ds(j_off, tn)]
                + sig_b_ref[:, pl.ds(j_off, tn)] * eps_j)   # (1, tn)
        o_ref[...] += bias


def _plain_linear_kernel(x_ref, mu_wT_ref, mu_b_ref, o_ref, *, tk, tn):
    # Eval path: plain tiled linear with mu parameters only (sigma never read).
    del tk
    j = pl.program_id(1)
    k = pl.program_id(2)

    @pl.when(k == 0)
    def _():
        o_ref[...] = jnp.zeros_like(o_ref)

    o_ref[...] += jnp.dot(x_ref[...].astype(mu_wT_ref.dtype), mu_wT_ref[...],
                          preferred_element_type=jnp.float32)

    @pl.when(k == pl.num_programs(2) - 1)
    def _():
        j_off = pl.multiple_of(j * tn, 128)
        o_ref[...] += mu_b_ref[:, pl.ds(j_off, tn)]


# --------------------------- one-time packing -------------------------------


def pack_params(mu_w, sig_w, mu_b, sig_b, *, weight_dtype=jnp.bfloat16,
                tn=None, tk=None):
    """One-time (init-time) repack: pad + transpose the weights to a lane-dense
    (num_in, num_out) layout and down-cast to bf16 so the per-call forward
    never repacks them (they are only read, once, by the kernel)."""
    num_out, num_in = mu_w.shape
    Np128 = _round_up(num_out, 128)
    Kp128 = _round_up(num_in, 128)

    if tn is None:
        # >= 2 tiles along num_out when possible so v7x's two TensorCores both
        # get work under the "parallel" j axis; 128-aligned, capped at 512.
        if Np128 >= 256:
            tn = min(512, _round_up((Np128 + 1) // 2, 128))
        else:
            tn = Np128
    if tk is None:
        # Big K tiles so each grid step streams several MiB of weights
        # (the ~0.35us per-step overhead dominates otherwise, esp. on v7x).
        tk = min(2048, Kp128)

    Np = _round_up(num_out, tn)
    Kp = _round_up(num_in, tk)

    wdt = weight_dtype
    f32 = jnp.float32
    mu_wT = jnp.zeros((Kp, Np), wdt).at[:num_in, :num_out].set(mu_w.T.astype(wdt))
    sig_wT = jnp.zeros((Kp, Np), wdt).at[:num_in, :num_out].set(sig_w.T.astype(wdt))
    mu_b2 = jnp.zeros((1, Np), f32).at[0, :num_out].set(mu_b.astype(f32))
    sig_b2 = jnp.zeros((1, Np), f32).at[0, :num_out].set(sig_b.astype(f32))
    return dict(mu_wT=mu_wT, sig_wT=sig_wT, mu_b=mu_b2, sig_b=sig_b2,
                num_in=num_in, num_out=num_out, Kp=Kp, Np=Np, tn=tn, tk=tk)


# ------------------------------ forward -------------------------------------


def factorized_noisy_linear(x, packed, eps_i, eps_j, is_training=True, *,
                            tb_max=256):
    """x: (B, num_in). Returns (B, num_out) f32."""
    num_in, num_out = packed["num_in"], packed["num_out"]
    Kp, Np, tn, tk = packed["Kp"], packed["Np"], packed["tn"], packed["tk"]
    f32 = jnp.float32

    B = x.shape[0]
    tb = min(_round_up(max(B, 1), 8), _round_up(tb_max, 8))
    Bp = _round_up(max(B, 1), tb)

    # Per-call padding: only x and the tiny noise vectors (weights are packed
    # once at init).
    x_p = jnp.zeros((Bp, Kp), f32).at[:B, :num_in].set(x.astype(f32))

    grid = (Bp // tb, Np // tn, Kp // tk)
    x_spec = pl.BlockSpec((tb, tk), lambda b, j, k: (b, k))
    w_spec = pl.BlockSpec((tk, tn), lambda b, j, k: (k, j))
    vec_n_spec = pl.BlockSpec((1, Np), lambda b, j, k: (0, 0))   # whole, resident
    vec_k_spec = pl.BlockSpec((1, Kp), lambda b, j, k: (0, 0))
    out_spec = pl.BlockSpec((tb, tn), lambda b, j, k: (b, j))    # f32 accumulator

    # VMEM budget: double-buffered weight streams + x, plus output block and
    # the small resident vectors. Floor 32 MiB, cap 64 MiB (v7x physical).
    wbytes = jnp.dtype(packed["mu_wT"].dtype).itemsize
    n_w_streams = 2 if is_training else 1
    vmem_need = (2 * n_w_streams * tk * tn * wbytes
                 + 2 * tb * tk * 4
                 + 2 * tb * tn * 4
                 + 8 * (Kp + 3 * Np))
    vmem_limit = int(min(64 << 20, max(32 << 20, 2 * vmem_need)))
    cparams = pltpu.CompilerParams(
        dimension_semantics=("parallel", "parallel", "arbitrary"),
        vmem_limit_bytes=vmem_limit)

    if is_training:
        eps_i2 = jnp.zeros((1, Kp), f32).at[0, :num_in].set(eps_i.astype(f32))
        eps_j2 = jnp.zeros((1, Np), f32).at[0, :num_out].set(eps_j.astype(f32))
        y_p = pl.pallas_call(
            functools.partial(_noisy_linear_train_kernel, tk=tk, tn=tn),
            out_shape=jax.ShapeDtypeStruct((Bp, Np), f32),
            grid_spec=pltpu.PrefetchScalarGridSpec(
                num_scalar_prefetch=0, grid=grid,
                in_specs=[x_spec, w_spec, w_spec,
                          vec_n_spec, vec_n_spec, vec_k_spec, vec_n_spec],
                out_specs=out_spec),
            compiler_params=cparams,
        )(x_p, packed["mu_wT"], packed["sig_wT"],
          packed["mu_b"], packed["sig_b"], eps_i2, eps_j2)
    else:
        y_p = pl.pallas_call(
            functools.partial(_plain_linear_kernel, tk=tk, tn=tn),
            out_shape=jax.ShapeDtypeStruct((Bp, Np), f32),
            grid_spec=pltpu.PrefetchScalarGridSpec(
                num_scalar_prefetch=0, grid=grid,
                in_specs=[x_spec, w_spec, vec_n_spec],
                out_specs=out_spec),
            compiler_params=cparams,
        )(x_p, packed["mu_wT"], packed["mu_b"])

    # Padded rows / columns are sliced off here (do not remove).
    return y_p[:B, :num_out]


# ------------------------------ utilities -----------------------------------


def _factorized_noise(key, n):
    e = jax.random.normal(key, (n,), dtype=jnp.float32)
    return jnp.sign(e) * jnp.sqrt(jnp.abs(e))


def init_params(key, num_in, num_out):
    """Matches reset_parameters()."""
    std = 1.0 / math.sqrt(num_in)
    k_w, k_b = jax.random.split(key)
    mu_w = jax.random.uniform(k_w, (num_out, num_in), jnp.float32, -std, std)
    mu_b = jax.random.uniform(k_b, (num_out,), jnp.float32, -std, std)
    sig_w = jnp.full((num_out, num_in), 0.5 / math.sqrt(num_in), jnp.float32)
    sig_b = jnp.full((num_out,), 0.5 / math.sqrt(num_in), jnp.float32)
    return mu_w, mu_b, sig_w, sig_b


if __name__ == "__main__":
    # Small, non-aligned shapes so padding, the 3-D grid and the k-accumulation
    # path are all exercised.
    batch, num_in, num_out = 5, 300, 200

    key = jax.random.PRNGKey(0)
    k_param, k_x, k_ei, k_ej = jax.random.split(key, 4)

    mu_w, mu_b, sig_w, sig_b = init_params(k_param, num_in, num_out)
    x = jax.random.normal(k_x, (batch, num_in), dtype=jnp.float32)

    # forward() calls reset_noise() first — sample fresh factorized noise.
    eps_i = _factorized_noise(k_ei, num_in)
    eps_j = _factorized_noise(k_ej, num_out)

    # One-time repack (init-time, not per forward). Small tiles for the first
    # run so the k-accumulation path (grid = (1, 2, 3)) is exercised; the
    # second run uses the production defaults.
    packed_small = pack_params(mu_w, sig_w, mu_b, sig_b, tn=128, tk=128)
    packed = pack_params(mu_w, sig_w, mu_b, sig_b)

    # Training path.
    y = jax.block_until_ready(
        factorized_noisy_linear(x, packed_small, eps_i, eps_j, is_training=True))
    assert y.shape == (batch, num_out)

    # Reference with identical bf16 rounding of weights/activations (tight).
    f32, bf = jnp.float32, jnp.bfloat16
    mu_w_b = mu_w.astype(bf).astype(f32)
    sig_w_b = sig_w.astype(bf).astype(f32)
    xb = x.astype(bf).astype(f32)
    xe = (x * eps_i[None, :]).astype(bf).astype(f32)
    y_ref_bf = (xb @ mu_w_b.T + (xe @ sig_w_b.T) * eps_j[None, :]
                + (mu_b + sig_b * eps_j))
    assert jnp.allclose(y, y_ref_bf, atol=3e-3, rtol=3e-3)

    # Exact PyTorch-semantics reference (loose — weights streamed in bf16).
    w_full = mu_w + sig_w * (eps_j[:, None] * eps_i[None, :])
    b_full = mu_b + sig_b * eps_j
    y_ref = x @ w_full.T + b_full
    assert jnp.allclose(y, y_ref, atol=1e-1, rtol=1e-1)

    # Training path with default (large) tiles — same answer.
    y2 = jax.block_until_ready(
        factorized_noisy_linear(x, packed, eps_i, eps_j, is_training=True))
    assert jnp.allclose(y2, y_ref_bf, atol=3e-3, rtol=3e-3)

    # Eval path (dedicated mu-only kernel).
    y_eval = jax.block_until_ready(
        factorized_noisy_linear(x, packed, eps_i, eps_j, is_training=False))
    y_eval_ref = xb @ mu_w_b.T + mu_b
    assert jnp.allclose(y_eval, y_eval_ref, atol=3e-3, rtol=3e-3)

    print("KERNEL_OK")
</pallas_src>

<mosaic_0001>
module attributes {stable_mosaic.version = 11 : i64} {
  func.func @_noisy_linear_train_kernel(%arg0: i32, %arg1: i32, %arg2: i32, %arg3: memref<8x128xf32, #tpu.memory_space<vmem>>, %arg4: memref<128x128xbf16, #tpu.memory_space<vmem>>, %arg5: memref<128x128xbf16, #tpu.memory_space<vmem>>, %arg6: memref<1x256xf32, #tpu.memory_space<vmem>>, %arg7: memref<1x256xf32, #tpu.memory_space<vmem>>, %arg8: memref<1x384xf32, #tpu.memory_space<vmem>>, %arg9: memref<1x256xf32, #tpu.memory_space<vmem>>, %arg10: memref<8x128xf32, #tpu.memory_space<vmem>>) attributes {dimension_semantics = [#tpu.dimension_semantics<parallel>, #tpu.dimension_semantics<parallel>, #tpu.dimension_semantics<arbitrary>], iteration_bounds = array<i64: 1, 2, 3>, scalar_prefetch = 0 : i64, scratch_operands = 0 : i64, tpu.core_type = #tpu.core_type<tc>, window_params = [{transform_indices = @transform_0, window_bounds = array<i64: 8, 128>}, {transform_indices = @transform_1, window_bounds = array<i64: 128, 128>}, {transform_indices = @transform_2, window_bounds = array<i64: 128, 128>}, {pipeline_mode = #tpu.pipeline_mode<synchronous>, transform_indices = @transform_3, window_bounds = array<i64: 1, 256>}, {pipeline_mode = #tpu.pipeline_mode<synchronous>, transform_indices = @transform_4, window_bounds = array<i64: 1, 256>}, {pipeline_mode = #tpu.pipeline_mode<synchronous>, transform_indices = @transform_5, window_bounds = array<i64: 1, 384>}, {pipeline_mode = #tpu.pipeline_mode<synchronous>, transform_indices = @transform_6, window_bounds = array<i64: 1, 256>}, {transform_indices = @transform_7, window_bounds = array<i64: 8, 128>}]} {
    %c0_i32 = arith.constant 0 : i32
    %0 = arith.cmpi eq, %arg2, %c0_i32 : i32
    %1 = arith.extui %0 : i1 to i32
    %c0_i32_0 = arith.constant 0 : i32
    %2 = arith.cmpi ne, %1, %c0_i32_0 : i32
    scf.if %2 {
      %cst_15 = arith.constant 0.000000e+00 : f32
      %29 = vector.broadcast %cst_15 : f32 to vector<8x128xf32>
      %c0_16 = arith.constant 0 : index
      %c0_17 = arith.constant 0 : index
      %30 = vector.load %arg10[%c0_16, %c0_17] : memref<8x128xf32, #tpu.memory_space<vmem>>, vector<8x128xf32>
      tpu.vector_store %arg10[%c0_16, %c0_17], %29 {strides = array<i32>} : memref<8x128xf32, #tpu.memory_space<vmem>>, vector<8x128xf32>,
    } else {
    }
    %c128_i32 = arith.constant 128 : i32
    %3 = arith.muli %arg2, %c128_i32 : i32
    %4 = tpu.assume_multiple %3, 128 : i32
    %c128_i32_1 = arith.constant 128 : i32
    %5 = arith.muli %arg1, %c128_i32_1 : i32
    %6 = tpu.assume_multiple %5, 128 : i32
    %c0 = arith.constant 0 : index
    %7 = arith.index_cast %4 : i32 to index
    %8 = vector.load %arg8[%c0, %7] : memref<1x384xf32, #tpu.memory_space<vmem>>, vector<1x128xf32>
    %c0_2 = arith.constant 0 : index
    %9 = arith.index_cast %6 : i32 to index
    %10 = vector.load %arg9[%c0_2, %9] : memref<1x256xf32, #tpu.memory_space<vmem>>, vector<1x128xf32>
    %c0_3 = arith.constant 0 : index
    %c0_4 = arith.constant 0 : index
    %11 = vector.load %arg3[%c0_3, %c0_4] : memref<8x128xf32, #tpu.memory_space<vmem>>, vector<8x128xf32>
    %12 = arith.truncf %11 : vector<8x128xf32> to vector<8x128xbf16>
    %13 = vector.broadcast %8 : vector<1x128xf32> to vector<8x128xf32>
    %14 = arith.mulf %11, %13 : vector<8x128xf32>
    %15 = arith.truncf %14 : vector<8x128xf32> to vector<8x128xbf16>
    %c0_5 = arith.constant 0 : index
    %c0_6 = arith.constant 0 : index
    %16 = vector.load %arg10[%c0_5, %c0_6] : memref<8x128xf32, #tpu.memory_space<vmem>>, vector<8x128xf32>
    %c0_7 = arith.constant 0 : index
    %c0_8 = arith.constant 0 : index
    %17 = vector.load %arg4[%c0_7, %c0_8] : memref<128x128xbf16, #tpu.memory_space<vmem>>, vector<128x128xbf16>
    %cst = arith.constant dense<0.000000e+00> : vector<8x128xf32>
    %18 = tpu.matmul %12, %17, %cst {dimension_numbers = #tpu.dot_dimension_numbers<[1], [0], [0], [1], [0, 0, 1, 1], [], []>} : vector<8x128xbf16>, vector<128x128xbf16>, vector<8x128xf32> -> vector<8x128xf32>
    %c0_9 = arith.constant 0 : index
    %c0_10 = arith.constant 0 : index
    %19 = vector.load %arg5[%c0_9, %c0_10] : memref<128x128xbf16, #tpu.memory_space<vmem>>, vector<128x128xbf16>
    %cst_11 = arith.constant dense<0.000000e+00> : vector<8x128xf32>
    %20 = tpu.matmul %15, %19, %cst_11 {dimension_numbers = #tpu.dot_dimension_numbers<[1], [0], [0], [1], [0, 0, 1, 1], [], []>} : vector<8x128xbf16>, vector<128x128xbf16>, vector<8x128xf32> -> vector<8x128xf32>
    %21 = vector.broadcast %10 : vector<1x128xf32> to vector<8x128xf32>
    %22 = arith.mulf %20, %21 : vector<8x128xf32>
    %23 = arith.addf %18, %22 : vector<8x128xf32>
    %24 = arith.addf %16, %23 : vector<8x128xf32>
    %c0_12 = arith.constant 0 : index
    %c0_13 = arith.constant 0 : index
    %25 = vector.load %arg10[%c0_12, %c0_13] : memref<8x128xf32, #tpu.memory_space<vmem>>, vector<8x128xf32>
    tpu.vector_store %arg10[%c0_12, %c0_13], %24 {strides = array<i32>} : memref<8x128xf32, #tpu.memory_space<vmem>>, vector<8x128xf32>,
    %c2_i32 = arith.constant 2 : i32
    %26 = arith.cmpi eq, %arg2, %c2_i32 : i32
    %27 = arith.extui %26 : i1 to i32
    %c0_i32_14 = arith.constant 0 : i32
    %28 = arith.cmpi ne, %27, %c0_i32_14 : i32
    scf.if %28 {
      %c0_15 = arith.constant 0 : index
      %29 = arith.index_cast %6 : i32 to index
      %30 = vector.load %arg6[%c0_15, %29] : memref<1x256xf32, #tpu.memory_space<vmem>>, vector<1x128xf32>
      %c0_16 = arith.constant 0 : index
      %31 = arith.index_cast %6 : i32 to index
      %32 = vector.load %arg7[%c0_16, %31] : memref<1x256xf32, #tpu.memory_space<vmem>>, vector<1x128xf32>
      %33 = arith.mulf %32, %10 : vector<1x128xf32>
      %34 = arith.addf %30, %33 : vector<1x128xf32>
      %c0_17 = arith.constant 0 : index
      %c0_18 = arith.constant 0 : index
      %35 = vector.load %arg10[%c0_17, %c0_18] : memref<8x128xf32, #tpu.memory_space<vmem>>, vector<8x128xf32>
      %36 = vector.broadcast %34 : vector<1x128xf32> to vector<8x128xf32>
      %37 = arith.addf %35, %36 : vector<8x128xf32>
      %c0_19 = arith.constant 0 : index
      %c0_20 = arith.constant 0 : index
      %38 = vector.load %arg10[%c0_19, %c0_20] : memref<8x128xf32, #tpu.memory_space<vmem>>, vector<8x128xf32>
      tpu.vector_store %arg10[%c0_19, %c0_20], %37 {strides = array<i32>} : memref<8x128xf32, #tpu.memory_space<vmem>>, vector<8x128xf32>,
    } else {
    }
    return
  }
  func.func @transform_0(%arg0: i32, %arg1: i32, %arg2: i32) -> (i32, i32) {
    %c0_i32 = arith.constant 0 : i32
    return %arg0, %arg2 : i32, i32
  }
  func.func @transform_1(%arg0: i32, %arg1: i32, %arg2: i32) -> (i32, i32) {
    %c0_i32 = arith.constant 0 : i32
    return %arg2, %arg1 : i32, i32
  }
  func.func @transform_2(%arg0: i32, %arg1: i32, %arg2: i32) -> (i32, i32) {
    %c0_i32 = arith.constant 0 : i32
    return %arg2, %arg1 : i32, i32
  }
  func.func @transform_3(%arg0: i32, %arg1: i32, %arg2: i32) -> (i32, i32) {
    %c0_i32 = arith.constant 0 : i32
    %c0_i32_0 = arith.constant 0 : i32
    %c0_i32_1 = arith.constant 0 : i32
    return %c0_i32, %c0_i32_0 : i32, i32
  }
  func.func @transform_4(%arg0: i32, %arg1: i32, %arg2: i32) -> (i32, i32) {
    %c0_i32 = arith.constant 0 : i32
    %c0_i32_0 = arith.constant 0 : i32
    %c0_i32_1 = arith.constant 0 : i32
    return %c0_i32, %c0_i32_0 : i32, i32
  }
  func.func @transform_5(%arg0: i32, %arg1: i32, %arg2: i32) -> (i32, i32) {
    %c0_i32 = arith.constant 0 : i32
    %c0_i32_0 = arith.constant 0 : i32
    %c0_i32_1 = arith.constant 0 : i32
    return %c0_i32, %c0_i32_0 : i32, i32
  }
  func.func @transform_6(%arg0: i32, %arg1: i32, %arg2: i32) -> (i32, i32) {
    %c0_i32 = arith.constant 0 : i32
    %c0_i32_0 = arith.constant 0 : i32
    %c0_i32_1 = arith.constant 0 : i32
    return %c0_i32, %c0_i32_0 : i32, i32
  }
  func.func @transform_7(%arg0: i32, %arg1: i32, %arg2: i32) -> (i32, i32) {
    %c0_i32 = arith.constant 0 : i32
    return %arg0, %arg1 : i32, i32
  }
}

</mosaic_0001>

<llo_original>
// kernel: tpu_custom_call.1
$region0: #{tpu_custom_call.1}
  #allocation0 [shape = 'u32[]', space=smem, size = 0x4, offset = 0x4, fixed_abs, tag = 'smem constant byte address 0x4 - core index']
  #allocation1 [shape = 'u32[144,128]{1,0:T(1,128)}', space=vmem, size = 0x12000, scoped, tag = 'internal scratch']
  %s0 = inlined_call_operand.hbm [shape: f32[8,384], index: 0, kind: input, shape index: {}]
  %s1 = inlined_call_operand.hbm [shape: bf16[384,256], index: 1, kind: input, shape index: {}]
  %s2 = inlined_call_operand.hbm [shape: bf16[384,256], index: 2, kind: input, shape index: {}]
  %s3 = inlined_call_operand.vmem [shape: f32[1,256], index: 3, kind: input, shape index: {}]
  %s4 = inlined_call_operand.vmem [shape: f32[1,256], index: 4, kind: input, shape index: {}]
  %s5 = inlined_call_operand.vmem [shape: f32[1,384], index: 5, kind: input, shape index: {}]
  %s6 = inlined_call_operand.vmem [shape: f32[1,256], index: 6, kind: input, shape index: {}]
  %s7 = inlined_call_operand.hbm [shape: f32[8,256], index: 7, kind: output, shape index: {}]
  %s8 = sld [smem:[#allocation0]]
  $region81: #{tpu_custom_call.1} parent=0
    _
  %s10 = ssub.s32 1, %s8
  %s11 = scalar_select 0, %s10, %s8
  $region1: #{tpu_custom_call.1} parent=0
    #allocation2 [shape = 'u8[8192]{0}', space=vmem, size = 0x2000, scoped, tag = 'input window, operand 0']
    #allocation3 [shape = 's32[2]{0}', space=sflag, size = 0x8, scoped, tag = 'scoped memory for tpu_custom_call.1']
    #allocation4 [shape = 's32[2]{0}', space=sflag, size = 0x8, scoped, tag = 'scoped memory for tpu_custom_call.1']
    #allocation5 [shape = 'u8[65536]{0}', space=vmem, size = 0x10000, scoped, tag = 'input window, operand 1']
    #allocation6 [shape = 's32[2]{0}', space=sflag, size = 0x8, scoped, tag = 'scoped memory for tpu_custom_call.1']
    #allocation7 [shape = 'u8[65536]{0}', space=vmem, size = 0x10000, scoped, tag = 'input window, operand 2']
    #allocation8 [shape = 'u8[8192]{0}', space=vmem, size = 0x2000, scoped, tag = 'output window, operand 0']
    %12 = vsyncpa [#allocation3], 0
    %s13 = scalar_lea.sflag [#allocation3], 1
    %14 = vsyncpa %s13, 0
    %15 = vsyncpa [#allocation6], 0
    %s16 = scalar_lea.sflag [#allocation6], 1
    %17 = vsyncpa %s16, 0
    %18 = vsyncpa [#allocation4], 0
    %s19 = scalar_lea.sflag [#allocation4], 1
    %20 = vsyncpa %s19, 0
    loop: start=0, step=1, limit=8
    $region2: #{tpu_custom_call.1} parent=1 // loop_pre_header
      _
    $region3: #{tpu_custom_call.1} parent=1 // loop_header
      %s22 = sphi 0, %s26
      %p23 = scmp.ge.s32.totalorder %s22, 8
      %s29 = sphi 0, %s48
      %s30 = sphi 0, %s44
      %s31 = sphi 0, %s40
      %s32 = sphi 0, %s29
      %s33 = sphi 0, %s30
      %s34 = sphi 0, %s31
      %s35 = sphi 0, %s32
      %s36 = sphi 0, %s33
      %s37 = sphi 0, %s34
      %s53 = sphi 0, %s55
      %s56 = sphi 0, %s53
      %s57 = sphi 0, %s56
      %s73 = sphi 0, %s57
      %s81 = sphi 0, %s83
      %s84 = sphi 0, %s81
      %s85 = sphi 0, %s84
      %s101 = sphi 0, %s85
      %s109 = sphi 0, %s111
      %s112 = sphi 0, %s109
      %s113 = sphi 0, %s112
      %s129 = sphi 0, %s113
      %s133 = sphi 0, %s133
      %s135 = sphi 0, %s133
      %s136 = sphi 0, %s135
      %s150 = sphi 0, %s136
      %s154 = sphi 0, %s154
      %s156 = sphi 0, %s154
      %s157 = sphi 0, %s156
      %s171 = sphi 0, %s157
      %s175 = sphi 0, %s175
      %s177 = sphi 0, %s175
      %s178 = sphi 0, %s177
      %s192 = sphi 0, %s178
      %s196 = sphi 0, %s196
      %s198 = sphi 0, %s196
      %s199 = sphi 0, %s198
      %s213 = sphi 0, %s199
      %s221 = sphi 0, %s223
      %s224 = sphi 0, %s221
      %s225 = sphi 0, %s224
      %s241 = sphi 0, %s225
    $region4: #{tpu_custom_call.1} parent=1 // loop_header_branch
      %25 = sbr.rel (%p23) target = $region8
    $region5: #{tpu_custom_call.1} parent=1 // loop_body
      %s27 = ssub.s32 %s22, 1
      %s28 = ssub.s32 %s22, 2
      %s38 = sadd.s32 1, %s31
      %p39 = scmp.ge.s32.totalorder %s38, 3
      %s40 = scalar_select %p39, 0, %s38
      %s41 = sadd.s32 1, %s30
      %s42 = scalar_select %p39, %s41, %s30
      %p43 = scmp.ge.s32.totalorder %s42, 2
      %s44 = scalar_select %p43, 0, %s42
      %s45 = sadd.s32 1, %s29
      %s46 = scalar_select %p43, %s45, %s29
      %p47 = scmp.ge.s32.totalorder %s46, 1
      %s48 = scalar_select %p47, 0, %s46
      %s49 = ssub.s32 %s29, %s48
      %s50 = ssub.s32 %s31, %s40
      %s51 = sor.u32 %s49, %s50
      %p52 = scmp.eq.s32.totalorder %s51, 0
      %s54 = sadd.s32 %s53, 1
      %s55 = scalar_select %p52, %s53, %s54
      %p58 = pneg %p52
      %p59 = scmp.eq.s32.totalorder %s22, 5
      %p60 = por %p58, %p59
      %p61 = scmp.ne.s32.totalorder %s53, %s56
      %p62 = scmp.eq.s32.totalorder %s22, 0
      %p63 = por %p61, %p62
      %p64 = scmp.ne.s32.totalorder %s53, %s56
      %p65 = scmp.eq.s32.totalorder %s27, 5
      %p66 = por %p64, %p65
      %p67 = scmp.ne.s32.totalorder %s56, %s57
      %p68 = scmp.eq.s32.totalorder %s27, 0
      %p69 = por %p67, %p68
      %p70 = scmp.ne.s32.totalorder %s56, %s57
      %p71 = scmp.eq.s32.totalorder %s28, 5
      %p72 = por %p70, %p71
      %p74 = scmp.ne.s32.totalorder %s57, %s73
      %p75 = scmp.eq.s32.totalorder %s28, 0
      %p76 = por %p74, %p75
      %s77 = ssub.s32 %s31, %s40
      %s78 = ssub.s32 %s30, %s44
      %s79 = sor.u32 %s77, %s78
      %p80 = scmp.eq.s32.totalorder %s79, 0
      %s82 = sadd.s32 %s81, 1
      %s83 = scalar_select %p80, %s81, %s82
      %p86 = pneg %p80
      %p87 = scmp.eq.s32.totalorder %s22, 5
      %p88 = por %p86, %p87
      %p89 = scmp.ne.s32.totalorder %s81, %s84
      %p90 = scmp.eq.s32.totalorder %s22, 0
      %p91 = por %p89, %p90
      %p92 = scmp.ne.s32.totalorder %s81, %s84
      %p93 = scmp.eq.s32.totalorder %s27, 5
      %p94 = por %p92, %p93
      %p95 = scmp.ne.s32.totalorder %s84, %s85
      %p96 = scmp.eq.s32.totalorder %s27, 0
      %p97 = por %p95, %p96
      %p98 = scmp.ne.s32.totalorder %s84, %s85
      %p99 = scmp.eq.s32.totalorder %s28, 5
      %p100 = por %p98, %p99
      %p102 = scmp.ne.s32.totalorder %s85, %s101
      %p103 = scmp.eq.s32.totalorder %s28, 0
      %p104 = por %p102, %p103
      %s105 = ssub.s32 %s31, %s40
      %s106 = ssub.s32 %s30, %s44
      %s107 = sor.u32 %s105, %s106
      %p108 = scmp.eq.s32.totalorder %s107, 0
      %s110 = sadd.s32 %s109, 1
      %s111 = scalar_select %p108, %s109, %s110
      %p114 = pneg %p108
      %p115 = scmp.eq.s32.totalorder %s22, 5
      %p116 = por %p114, %p115
      %p117 = scmp.ne.s32.totalorder %s109, %s112
      %p118 = scmp.eq.s32.totalorder %s22, 0
      %p119 = por %p117, %p118
      %p120 = scmp.ne.s32.totalorder %s109, %s112
      %p121 = scmp.eq.s32.totalorder %s27, 5
      %p122 = por %p120, %p121
      %p123 = scmp.ne.s32.totalorder %s112, %s113
      %p124 = scmp.eq.s32.totalorder %s27, 0
      %p125 = por %p123, %p124
      %p126 = scmp.ne.s32.totalorder %s112, %s113
      %p127 = scmp.eq.s32.totalorder %s28, 5
      %p128 = por %p126, %p127
      %p130 = scmp.ne.s32.totalorder %s113, %s129
      %p131 = scmp.eq.s32.totalorder %s28, 0
      %p132 = por %p130, %p131
      %s134 = sadd.s32 %s133, 1
      %p137 = scmp.eq.s32.totalorder %s22, 5
      %p138 = scmp.ne.s32.totalorder %s133, %s135
      %p139 = scmp.eq.s32.totalorder %s22, 0
      %p140 = por %p138, %p139
      %p141 = scmp.ne.s32.totalorder %s133, %s135
      %p142 = scmp.eq.s32.totalorder %s27, 5
      %p143 = por %p141, %p142
      %p144 = scmp.ne.s32.totalorder %s135, %s136
      %p145 = scmp.eq.s32.totalorder %s27, 0
      %p146 = por %p144, %p145
      %p147 = scmp.ne.s32.totalorder %s135, %s136
      %p148 = scmp.eq.s32.totalorder %s28, 5
      %p149 = por %p147, %p148
      %p151 = scmp.ne.s32.totalorder %s136, %s150
      %p152 = scmp.eq.s32.totalorder %s28, 0
      %p153 = por %p151, %p152
      %s155 = sadd.s32 %s154, 1
      %p158 = scmp.eq.s32.totalorder %s22, 5
      %p159 = scmp.ne.s32.totalorder %s154, %s156
      %p160 = scmp.eq.s32.totalorder %s22, 0
      %p161 = por %p159, %p160
      %p162 = scmp.ne.s32.totalorder %s154, %s156
      %p163 = scmp.eq.s32.totalorder %s27, 5
      %p164 = por %p162, %p163
      %p165 = scmp.ne.s32.totalorder %s156, %s157
      %p166 = scmp.eq.s32.totalorder %s27, 0
      %p167 = por %p165, %p166
      %p168 = scmp.ne.s32.totalorder %s156, %s157
      %p169 = scmp.eq.s32.totalorder %s28, 5
      %p170 = por %p168, %p169
      %p172 = scmp.ne.s32.totalorder %s157, %s171
      %p173 = scmp.eq.s32.totalorder %s28, 0
      %p174 = por %p172, %p173
      %s176 = sadd.s32 %s175, 1
      %p179 = scmp.eq.s32.totalorder %s22, 5
      %p180 = scmp.ne.s32.totalorder %s175, %s177
      %p181 = scmp.eq.s32.totalorder %s22, 0
      %p182 = por %p180, %p181
      %p183 = scmp.ne.s32.totalorder %s175, %s177
      %p184 = scmp.eq.s32.totalorder %s27, 5
      %p185 = por %p183, %p184
      %p186 = scmp.ne.s32.totalorder %s177, %s178
      %p187 = scmp.eq.s32.totalorder %s27, 0
      %p188 = por %p186, %p187
      %p189 = scmp.ne.s32.totalorder %s177, %s178
      %p190 = scmp.eq.s32.totalorder %s28, 5
      %p191 = por %p189, %p190
      %p193 = scmp.ne.s32.totalorder %s178, %s192
      %p194 = scmp.eq.s32.totalorder %s28, 0
      %p195 = por %p193, %p194
      %s197 = sadd.s32 %s196, 1
      %p200 = scmp.eq.s32.totalorder %s22, 5
      %p201 = scmp.ne.s32.totalorder %s196, %s198
      %p202 = scmp.eq.s32.totalorder %s22, 0
      %p203 = por %p201, %p202
      %p204 = scmp.ne.s32.totalorder %s196, %s198
      %p205 = scmp.eq.s32.totalorder %s27, 5
      %p206 = por %p204, %p205
      %p207 = scmp.ne.s32.totalorder %s198, %s199
      %p208 = scmp.eq.s32.totalorder %s27, 0
      %p209 = por %p207, %p208
      %p210 = scmp.ne.s32.totalorder %s198, %s199
      %p211 = scmp.eq.s32.totalorder %s28, 5
      %p212 = por %p210, %p211
      %p214 = scmp.ne.s32.totalorder %s199, %s213
      %p215 = scmp.eq.s32.totalorder %s28, 0
      %p216 = por %p214, %p215
      %s217 = ssub.s32 %s29, %s48
      %s218 = ssub.s32 %s30, %s44
      %s219 = sor.u32 %s217, %s218
      %p220 = scmp.eq.s32.totalorder %s219, 0
      %s222 = sadd.s32 %s221, 1
      %s223 = scalar_select %p220, %s221, %s222
      %p226 = pneg %p220
      %p227 = scmp.eq.s32.totalorder %s22, 5
      %p228 = por %p226, %p227
      %p229 = scmp.ne.s32.totalorder %s221, %s224
      %p230 = scmp.eq.s32.totalorder %s22, 0
      %p231 = por %p229, %p230
      %p232 = scmp.ne.s32.totalorder %s221, %s224
      %p233 = scmp.eq.s32.totalorder %s27, 5
      %p234 = por %p232, %p233
      %p235 = scmp.ne.s32.totalorder %s224, %s225
      %p236 = scmp.eq.s32.totalorder %s27, 0
      %p237 = por %p235, %p236
      %p238 = scmp.ne.s32.totalorder %s224, %s225
      %p239 = scmp.eq.s32.totalorder %s28, 5
      %p240 = por %p238, %p239
      %p242 = scmp.ne.s32.totalorder %s225, %s241
      %p243 = scmp.eq.s32.totalorder %s28, 0
      %p244 = por %p242, %p243
      %p245 = scmp.le.s32.totalorder 1, %s22
      %p246 = scmp.lt.s32.totalorder %s22, 7
      %p247 = pnand %p245, %p246
      %p248 = pneg %p247
      // Predicated region
      $region9: #{tpu_custom_call.1} parent=5 // pred_check
        _
      $region10: #{tpu_custom_call.1} parent=5 // pred_check_branch
        %250 = sbr.rel (%p247) target = $region12
      $region11: #{tpu_custom_call.1} parent=5 // pred_region
        %s251 = ssub.s32 %s22, 1
        // Predicated region
        $region13: #{tpu_custom_call.1} parent=11 // pred_check
          %p252 = pneg %p146
        $region14: #{tpu_custom_call.1} parent=11 // pred_check_branch
          %254 = sbr.rel (%p252) target = $region16
        $region15: #{tpu_custom_call.1} parent=11 // pred_region
          _
        $region16: #{tpu_custom_call.1} parent=11 // pred_fallthru
          _
        // Predicated region
        $region17: #{tpu_custom_call.1} parent=11 // pred_check
          %p255 = pneg %p167
        $region18: #{tpu_custom_call.1} parent=11 // pred_check_branch
          %257 = sbr.rel (%p255) target = $region20
        $region19: #{tpu_custom_call.1} parent=11 // pred_region
          _
        $region20: #{tpu_custom_call.1} parent=11 // pred_fallthru
          _
        // Predicated region
        $region21: #{tpu_custom_call.1} parent=11 // pred_check
          %p258 = pneg %p188
        $region22: #{tpu_custom_call.1} parent=11 // pred_check_branch
          %260 = sbr.rel (%p258) target = $region24
        $region23: #{tpu_custom_call.1} parent=11 // pred_region
          _
        $region24: #{tpu_custom_call.1} parent=11 // pred_fallthru
          _
        // Predicated region
        $region25: #{tpu_custom_call.1} parent=11 // pred_check
          %p261 = pneg %p209
        $region26: #{tpu_custom_call.1} parent=11 // pred_check_branch
          %263 = sbr.rel (%p261) target = $region28
        $region27: #{tpu_custom_call.1} parent=11 // pred_region
          _
        $region28: #{tpu_custom_call.1} parent=11 // pred_fallthru
          _
      $region12: #{tpu_custom_call.1} parent=5 // pred_fallthru
        _
      %p264 = scmp.lt.s32.totalorder %s22, 6
      // Predicated region
      $region29: #{tpu_custom_call.1} parent=5 // pred_check
        %p265 = pneg %p264
      $region30: #{tpu_custom_call.1} parent=5 // pred_check_branch
        %267 = sbr.rel (%p265) target = $region32
      $region31: #{tpu_custom_call.1} parent=5 // pred_region
        // Predicated region
        $region33: #{tpu_custom_call.1} parent=31 // pred_check
          %p268 = pneg %p63
        $region34: #{tpu_custom_call.1} parent=31 // pred_check_branch
          %270 = sbr.rel (%p268) target = $region36
        $region35: #{tpu_custom_call.1} parent=31 // pred_region
          %s271 = sand.u32 %s53, 1
          %s272 = scalar_lea.sflag [#allocation3], %s271
          %s273 = sand.u32 %s53, 1
          %s274 = smul.addr %s273, 8
          %s275 = scalar_lea.vmem [#allocation2], %s274
          %s277 = ssub.s32 128, 128
          %278 = vsyncadd %s272, %s277
          %s279 = smul.addr %s29, 3
          %s280 = sadd.s32 %s31, %s279
          %s281 = smul.addr %s280, 128
          %s282 = scalar_lea.hbm %s0, %s281
          %s284 = sshll.u32 %s275, 4
          %s285 = int_to_ptr.vmem [resolvable:$true] %s284
          %287 = dma.hbm_to_vmem [thread:$0]  %s282, 128, %s285, %s272
        $region36: #{tpu_custom_call.1} parent=31 // pred_fallthru
          _
        // Predicated region
        $region37: #{tpu_custom_call.1} parent=31 // pred_check
          %p288 = pneg %p91
        $region38: #{tpu_custom_call.1} parent=31 // pred_check_branch
          %290 = sbr.rel (%p288) target = $region40
        $region39: #{tpu_custom_call.1} parent=31 // pred_region
          %s291 = sand.u32 %s22, 1
          %s292 = scalar_lea.sflag [#allocation6], %s291
          %s293 = sand.u32 %s81, 1
          %s294 = smul.addr %s293, 64
          %s295 = scalar_lea.vmem [#allocation5], %s294
          %s296 = smul.u32 16, %s31
          %s298 = ssub.s32 1024, 1024
          %299 = vsyncadd %s292, %s298
          %s300 = smul.addr %s296, 2
          %s301 = sadd.s32 %s30, %s300
          %s302 = smul.addr %s301, 64
          %s303 = scalar_lea.hbm %s1, %s302
          %s304 = sshll.u32 %s295, 4
          %s305 = int_to_ptr.vmem [resolvable:$true] %s304
          %310 = dma.hbm_to_vmem [thread:$0]  %s303, 1024, %s305, %s292, 128, 64, 4
        $region40: #{tpu_custom_call.1} parent=31 // pred_fallthru
          _
        // Predicated region
        $region41: #{tpu_custom_call.1} parent=31 // pred_check
          %p311 = pneg %p119
        $region42: #{tpu_custom_call.1} parent=31 // pred_check_branch
          %313 = sbr.rel (%p311) target = $region44
        $region43: #{tpu_custom_call.1} parent=31 // pred_region
          %s314 = sand.u32 %s22, 1
          %s315 = scalar_lea.sflag [#allocation6], %s314
          %s316 = sand.u32 %s109, 1
          %s317 = smul.addr %s316, 64
          %s318 = scalar_lea.vmem [#allocation7], %s317
          %s319 = smul.u32 16, %s31
          %s321 = ssub.s32 1024, 1024
          %322 = vsyncadd %s315, %s321
          %s323 = smul.addr %s319, 2
          %s324 = sadd.s32 %s30, %s323
          %s325 = smul.addr %s324, 64
          %s326 = scalar_lea.hbm %s2, %s325
          %s327 = sshll.u32 %s318, 4
          %s328 = int_to_ptr.vmem [resolvable:$true] %s327
          %333 = dma.hbm_to_vmem [thread:$0]  %s326, 1024, %s328, %s315, 128, 64, 4
        $region44: #{tpu_custom_call.1} parent=31 // pred_fallthru
          _
      $region32: #{tpu_custom_call.1} parent=5 // pred_fallthru
        _
      %p334 = scmp.le.s32.totalorder 1, %s22
      %p335 = scmp.lt.s32.totalorder %s22, 7
      %p336 = pnand %p334, %p335
      %p337 = pneg %p336
      // Predicated region
      $region45: #{tpu_custom_call.1} parent=5 // pred_check
        _
      $region46: #{tpu_custom_call.1} parent=5 // pred_check_branch
        %339 = sbr.rel (%p336) target = $region48
      $region47: #{tpu_custom_call.1} parent=5 // pred_region
        %s340 = ssub.s32 %s22, 1
        %s341 = sand.u32 %s56, 1
        %s342 = scalar_lea.sflag [#allocation3], %s341
        %s343 = sand.u32 %s56, 1
        %s344 = smul.addr %s343, 8
        %s345 = scalar_lea.vmem [#allocation2], %s344
        // Predicated region
        $region49: #{tpu_custom_call.1} parent=47 // pred_check
          %p346 = pneg %p69
        $region50: #{tpu_custom_call.1} parent=47 // pred_check_branch
          %348 = sbr.rel (%p346) target = $region52
        $region51: #{tpu_custom_call.1} parent=47 // pred_region
          %349 = dma.done %s342, 128
        $region52: #{tpu_custom_call.1} parent=47 // pred_fallthru
          _
        %s350 = sand.u32 %s27, 1
        %s351 = scalar_lea.sflag [#allocation6], %s350
        %s352 = sand.u32 %s84, 1
        %s353 = smul.addr %s352, 64
        %s354 = scalar_lea.vmem [#allocation5], %s353
        // Predicated region
        $region53: #{tpu_custom_call.1} parent=47 // pred_check
          %p355 = pneg %p97
        $region54: #{tpu_custom_call.1} parent=47 // pred_check_branch
          %357 = sbr.rel (%p355) target = $region56
        $region55: #{tpu_custom_call.1} parent=47 // pred_region
          %358 = dma.done %s351, 1024
        $region56: #{tpu_custom_call.1} parent=47 // pred_fallthru
          _
        %s359 = sand.u32 %s27, 1
        %s360 = scalar_lea.sflag [#allocation6], %s359
        %s361 = sand.u32 %s112, 1
        %s362 = smul.addr %s361, 64
        %s363 = scalar_lea.vmem [#allocation7], %s362
        // Predicated region
        $region57: #{tpu_custom_call.1} parent=47 // pred_check
          %p364 = pneg %p125
        $region58: #{tpu_custom_call.1} parent=47 // pred_check_branch
          %366 = sbr.rel (%p364) target = $region60
        $region59: #{tpu_custom_call.1} parent=47 // pred_region
          %367 = dma.done %s360, 1024
        $region60: #{tpu_custom_call.1} parent=47 // pred_fallthru
          _
        %s368 = sand.u32 %s56, 1
        %s369 = scalar_lea.sflag [#allocation3], %s368
        %s370 = sand.u32 %s56, 1
        %s371 = smul.addr %s370, 8
        %s372 = scalar_lea.vmem [#allocation2], %s371
        %p373 = pneg %p69
        %p374 = pneg %p66
        %s375 = sand.u32 %s27, 1
        %s376 = scalar_lea.sflag [#allocation6], %s375
        %s377 = sand.u32 %s84, 1
        %s378 = smul.addr %s377, 64
        %s379 = scalar_lea.vmem [#allocation5], %s378
        %p380 = pneg %p97
        %p381 = pneg %p94
        %s382 = sand.u32 %s27, 1
        %s383 = scalar_lea.sflag [#allocation6], %s382
        %s384 = sand.u32 %s112, 1
        %s385 = smul.addr %s384, 64
        %s386 = scalar_lea.vmem [#allocation7], %s385
        %p387 = pneg %p125
        %p388 = pneg %p122
        %p389 = pneg %p146
        %p390 = pneg %p143
        %p391 = pneg %p167
        %p392 = pneg %p164
        %p393 = pneg %p188
        %p394 = pneg %p185
        %p395 = pneg %p209
        %p396 = pneg %p206
        %p397 = pneg %p237
        %p398 = pneg %p234
        %s399 = sand.u32 %s224, 1
        %s400 = scalar_lea.sflag [#allocation4], %s399
        %s401 = sand.u32 %s224, 1
        %s402 = smul.addr %s401, 8
        %s403 = scalar_lea.vmem [#allocation8], %s402
        %s404 = smul.u32 16, %s34
        %s405 = smul.u32 16, %s34
        %p407 = scmp.eq.s32.totalorder %s34, 0
        // Predicated region
        $region61: #{tpu_custom_call.1} parent=47 // pred_check
          %p408 = pneg %p407
        $region62: #{tpu_custom_call.1} parent=47 // pred_check_branch
          %410 = sbr.rel (%p408) target = $region64
        $region63: #{tpu_custom_call.1} parent=47 // pred_region
          %411 = vst [vmem:[%s403] sm:$0xff] 0.0
        $region64: #{tpu_custom_call.1} parent=47 // pred_fallthru
          _
        %s412 = smul.u32 %s34, 128
        %s413 = smul.u32 %s33, 128
        %s414 = sshra.s32 %s412, 7
        %s415 = sand.u32 %s412, 127
        %s416 = scalar_lea.vmem %s5, %s414
        %v417 = vld [vmem:[%s416] sm:$0x1]
        %s418 = sshra.s32 %s413, 7
        %s419 = sand.u32 %s413, 127
        %s420 = scalar_lea.vmem %s6, %s418
        %v421 = vld [vmem:[%s420] sm:$0x1]
        %v422 = vld [vmem:[%s345] sm:$0xff]
        %v423 = vpack.c.bf16 %v422, %v422
        %v425 = vlaneseq
        %v426 = vshrl.u32 %v425, 7
        %v427 = vsub.s32 0, %v426
        %v428 = vrot.slane %v417, %v427
        %v430 = vmul.f32 %v422, %v428
        %v431 = vpack.c.bf16 %v430, %v430
        %v432 = vld [vmem:[%s403] sm:$0xff]
        %v433 = vld [vmem:[%s354] sm:$0xf]
        %v434 = vld [vmem:[%s354 + $0x4] sm:$0xf]
        %v435 = vld [vmem:[%s354 + $0x8] sm:$0xf]
        %v436 = vld [vmem:[%s354 + $0xc] sm:$0xf]
        %v437 = vld [vmem:[%s354 + $0x10] sm:$0xf]
        %v438 = vld [vmem:[%s354 + $0x14] sm:$0xf]
        %v439 = vld [vmem:[%s354 + $0x18] sm:$0xf]
        %v440 = vld [vmem:[%s354 + $0x1c] sm:$0xf]
        %v441 = vld [vmem:[%s354 + $0x20] sm:$0xf]
        %v442 = vld [vmem:[%s354 + $0x24] sm:$0xf]
        %v443 = vld [vmem:[%s354 + $0x28] sm:$0xf]
        %v444 = vld [vmem:[%s354 + $0x2c] sm:$0xf]
        %v445 = vld [vmem:[%s354 + $0x30] sm:$0xf]
        %v446 = vld [vmem:[%s354 + $0x34] sm:$0xf]
        %v447 = vld [vmem:[%s354 + $0x38] sm:$0xf]
        %v448 = vld [vmem:[%s354 + $0x3c] sm:$0xf]
        %v449 = vld [vmem:[%s363] sm:$0xf]
        %v450 = vld [vmem:[%s363 + $0x4] sm:$0xf]
        %v451 = vld [vmem:[%s363 + $0x8] sm:$0xf]
        %v452 = vld [vmem:[%s363 + $0xc] sm:$0xf]
        %v453 = vld [vmem:[%s363 + $0x10] sm:$0xf]
        %v454 = vld [vmem:[%s363 + $0x14] sm:$0xf]
        %v455 = vld [vmem:[%s363 + $0x18] sm:$0xf]
        %v456 = vld [vmem:[%s363 + $0x1c] sm:$0xf]
        %v457 = vld [vmem:[%s363 + $0x20] sm:$0xf]
        %v458 = vld [vmem:[%s363 + $0x24] sm:$0xf]
        %v459 = vld [vmem:[%s363 + $0x28] sm:$0xf]
        %v460 = vld [vmem:[%s363 + $0x2c] sm:$0xf]
        %v461 = vld [vmem:[%s363 + $0x30] sm:$0xf]
        %v462 = vld [vmem:[%s363 + $0x34] sm:$0xf]
        %v463 = vld [vmem:[%s363 + $0x38] sm:$0xf]
        %v464 = vld [vmem:[%s363 + $0x3c] sm:$0xf]
        %v481 = vunpack.c.l.b16 %v449
        %v482 = vunpack.c.l.b16 %v450
        %v483 = vunpack.c.l.b16 %v451
        %v484 = vunpack.c.l.b16 %v452
        %v485 = vunpack.c.l.b16 %v453
        %v486 = vunpack.c.l.b16 %v454
        %v487 = vunpack.c.l.b16 %v455
        %v488 = vunpack.c.l.b16 %v456
        %v489 = vunpack.c.l.b16 %v457
        %v490 = vunpack.c.l.b16 %v458
        %v491 = vunpack.c.l.b16 %v459
        %v492 = vunpack.c.l.b16 %v460
        %v493 = vunpack.c.l.b16 %v461
        %v494 = vunpack.c.l.b16 %v462
        %v495 = vunpack.c.l.b16 %v463
        %v496 = vunpack.c.l.b16 %v464
        %v497 = vpack.c.b16 %v482, %v481
        %v498 = vpack.c.b16 %v484, %v483
        %v499 = vpack.c.b16 %v486, %v485
        %v500 = vpack.c.b16 %v488, %v487
        %v501 = vpack.c.b16 %v490, %v489
        %v502 = vpack.c.b16 %v492, %v491
        %v503 = vpack.c.b16 %v494, %v493
        %v504 = vpack.c.b16 %v496, %v495
        %513 = vmatprep.subr.bf16.mxu0 0
        %514 = vmatpush1.bf16.msra.mxu0 %v504
        %515 = vmatprep.subr.bf16.mxu0 0
        %516 = vmatpush1.bf16.msra.mxu0 %v503
        %517 = vmatprep.subr.bf16.mxu0 0
        %518 = vmatpush1.bf16.msra.mxu0 %v502
        %519 = vmatprep.subr.bf16.mxu0 0
        %520 = vmatpush1.bf16.msra.mxu0 %v501
        %521 = vmatprep.subr.bf16.mxu0 0
        %522 = vmatpush1.bf16.msra.mxu0 %v500
        %523 = vmatprep.subr.bf16.mxu0 0
        %524 = vmatpush1.bf16.msra.mxu0 %v499
        %525 = vmatprep.subr.bf16.mxu0 0
        %526 = vmatpush1.bf16.msra.mxu0 %v498
        %527 = vmatprep.subr.bf16.mxu0 0
        %528 = vmatpush1.bf16.msra.mxu0 %v497
        %529 = vmatprep.subr.bf16.mxu0 0
        %530 = vmatpush2.bf16.msra.mxu0 0
        %531 = vmatprep.subr.bf16.mxu0 0
        %532 = vmatpush2.bf16.msra.mxu0 0
        %533 = vmatprep.subr.bf16.mxu0 0
        %534 = vmatpush2.bf16.msra.mxu0 0
        %535 = vmatprep.subr.bf16.mxu0 0
        %536 = vmatpush2.bf16.msra.mxu0 0
        %537 = vmatprep.subr.bf16.mxu0 0
        %538 = vmatpush2.bf16.msra.mxu0 0
        %539 = vmatprep.subr.bf16.mxu0 0
        %540 = vmatpush2.bf16.msra.mxu0 0
        %541 = vmatprep.subr.bf16.mxu0 0
        %542 = vmatpush2.bf16.msra.mxu0 0
        %543 = vmatprep.subr.bf16.mxu0 0
        %544 = vmatpush2.bf16.msra.mxu0 0
        %545 = vmatprep.mubr.bf16.mxu0 0
        %546 = vmatmul.mubr.bf16.gmra.mxu0 %v431
        %v547 = vpop.f32.mrf.mxu0
        %v548 = vadd.f32 0.0, %v547
        %v549 = vpop.f32.mrf.mxu0
        %v550 = vpop.f32.mrf.mxu0
        %v551 = vpop.f32.mrf.mxu0
        %552 = vdwg.mxu0
        %v554 = vlaneseq
        %v555 = vshrl.u32 %v554, 7
        %v556 = vsub.s32 0, %v555
        %v557 = vrot.slane %v421, %v556
        %v559 = vmul.f32 %v548, %v557
        %v576 = vunpack.c.l.b16 %v433
        %v577 = vunpack.c.l.b16 %v434
        %v578 = vunpack.c.l.b16 %v435
        %v579 = vunpack.c.l.b16 %v436
        %v580 = vunpack.c.l.b16 %v437
        %v581 = vunpack.c.l.b16 %v438
        %v582 = vunpack.c.l.b16 %v439
        %v583 = vunpack.c.l.b16 %v440
        %v584 = vunpack.c.l.b16 %v441
        %v585 = vunpack.c.l.b16 %v442
        %v586 = vunpack.c.l.b16 %v443
        %v587 = vunpack.c.l.b16 %v444
        %v588 = vunpack.c.l.b16 %v445
        %v589 = vunpack.c.l.b16 %v446
        %v590 = vunpack.c.l.b16 %v447
        %v591 = vunpack.c.l.b16 %v448
        %v592 = vpack.c.b16 %v577, %v576
        %v593 = vpack.c.b16 %v579, %v578
        %v594 = vpack.c.b16 %v581, %v580
        %v595 = vpack.c.b16 %v583, %v582
        %v596 = vpack.c.b16 %v585, %v584
        %v597 = vpack.c.b16 %v587, %v586
        %v598 = vpack.c.b16 %v589, %v588
        %v599 = vpack.c.b16 %v591, %v590
        %608 = vmatprep.subr.bf16.mxu0 0
        %609 = vmatpush1.bf16.msra.mxu0 %v599
        %610 = vmatprep.subr.bf16.mxu0 0
        %611 = vmatpush1.bf16.msra.mxu0 %v598
        %612 = vmatprep.subr.bf16.mxu0 0
        %613 = vmatpush1.bf16.msra.mxu0 %v597
        %614 = vmatprep.subr.bf16.mxu0 0
        %615 = vmatpush1.bf16.msra.mxu0 %v596
        %616 = vmatprep.subr.bf16.mxu0 0
        %617 = vmatpush1.bf16.msra.mxu0 %v595
        %618 = vmatprep.subr.bf16.mxu0 0
        %619 = vmatpush1.bf16.msra.mxu0 %v594
        %620 = vmatprep.subr.bf16.mxu0 0
        %621 = vmatpush1.bf16.msra.mxu0 %v593
        %622 = vmatprep.subr.bf16.mxu0 0
        %623 = vmatpush1.bf16.msra.mxu0 %v592
        %624 = vmatprep.subr.bf16.mxu0 0
        %625 = vmatpush2.bf16.msra.mxu0 0
        %626 = vmatprep.subr.bf16.mxu0 0
        %627 = vmatpush2.bf16.msra.mxu0 0
        %628 = vmatprep.subr.bf16.mxu0 0
        %629 = vmatpush2.bf16.msra.mxu0 0
        %630 = vmatprep.subr.bf16.mxu0 0
        %631 = vmatpush2.bf16.msra.mxu0 0
        %632 = vmatprep.subr.bf16.mxu0 0
        %633 = vmatpush2.bf16.msra.mxu0 0
        %634 = vmatprep.subr.bf16.mxu0 0
        %635 = vmatpush2.bf16.msra.mxu0 0
        %636 = vmatprep.subr.bf16.mxu0 0
        %637 = vmatpush2.bf16.msra.mxu0 0
        %638 = vmatprep.subr.bf16.mxu0 0
        %639 = vmatpush2.bf16.msra.mxu0 0
        %640 = vmatprep.mubr.bf16.mxu0 0
        %641 = vmatmul.mubr.bf16.gmra.mxu0 %v423
        %v642 = vpop.f32.mrf.mxu0
        %v643 = vadd.f32 %v559, %v642
        %v644 = vpop.f32.mrf.mxu0
        %v645 = vpop.f32.mrf.mxu0
        %v646 = vpop.f32.mrf.mxu0
        %647 = vdwg.mxu0
        %v648 = vadd.f32 %v432, %v643
        %649 = vst [vmem:[%s403] sm:$0xff] %v648
        %p650 = scmp.eq.s32.totalorder %s34, 2
        // Predicated region
        $region65: #{tpu_custom_call.1} parent=47 // pred_check
          %p651 = pneg %p650
        $region66: #{tpu_custom_call.1} parent=47 // pred_check_branch
          %653 = sbr.rel (%p651) target = $region68
        $region67: #{tpu_custom_call.1} parent=47 // pred_region
          %s654 = scalar_lea.vmem %s3, %s418
          %v655 = vld [vmem:[%s654] sm:$0x1]
          %s656 = scalar_lea.vmem %s4, %s418
          %v657 = vld [vmem:[%s656] sm:$0x1]
          %v658 = vmul.f32 %v657, %v421
          %v659 = vadd.f32 %v655, %v658
          %v660 = vld [vmem:[%s403] sm:$0xff]
          %v662 = vlaneseq
          %v663 = vshrl.u32 %v662, 7
          %v664 = vsub.s32 0, %v663
          %v665 = vrot.slane %v659, %v664
          %v667 = vadd.f32 %v660, %v665
          %668 = vst [vmem:[%s403] sm:$0xff] %v667
        $region68: #{tpu_custom_call.1} parent=47 // pred_fallthru
          _
        %s669 = sand.u32 %s224, 1
        %s670 = scalar_lea.sflag [#allocation4], %s669
        %s671 = sand.u32 %s224, 1
        %s672 = smul.addr %s671, 8
        %s673 = scalar_lea.vmem [#allocation8], %s672
        // Predicated region
        $region69: #{tpu_custom_call.1} parent=47 // pred_check
          %p674 = pneg %p234
        $region70: #{tpu_custom_call.1} parent=47 // pred_check_branch
          %676 = sbr.rel (%p674) target = $region72
        $region71: #{tpu_custom_call.1} parent=47 // pred_region
          %s678 = ssub.s32 128, 128
          %679 = vsyncadd %s670, %s678
          %s680 = smul.addr %s32, 2
          %s681 = sadd.s32 %s33, %s680
          %s682 = smul.addr %s681, 128
          %s683 = scalar_lea.hbm %s7, %s682
          %s685 = sshll.u32 %s673, 4
          %s686 = int_to_ptr.vmem [resolvable:$true] %s685
          %688 = dma.vmem_to_hbm [thread:$0]  %s686, 128, %s683, %s670
        $region72: #{tpu_custom_call.1} parent=47 // pred_fallthru
          _
      $region48: #{tpu_custom_call.1} parent=5 // pred_fallthru
        _
      %p689 = scmp.le.s32.totalorder 2, %s22
      // Predicated region
      $region73: #{tpu_custom_call.1} parent=5 // pred_check
        %p690 = pneg %p689
      $region74: #{tpu_custom_call.1} parent=5 // pred_check_branch
        %692 = sbr.rel (%p690) target = $region76
      $region75: #{tpu_custom_call.1} parent=5 // pred_region
        %s693 = ssub.s32 %s22, 2
        // Predicated region
        $region77: #{tpu_custom_call.1} parent=75 // pred_check
          %p694 = pneg %p240
        $region78: #{tpu_custom_call.1} parent=75 // pred_check_branch
          %696 = sbr.rel (%p694) target = $region80
        $region79: #{tpu_custom_call.1} parent=75 // pred_region
          %s697 = sand.u32 %s225, 1
          %s698 = scalar_lea.sflag [#allocation4], %s697
          %s699 = sand.u32 %s225, 1
          %s700 = smul.addr %s699, 8
          %s701 = scalar_lea.vmem [#allocation8], %s700
          %702 = dma.done %s698, 128
        $region80: #{tpu_custom_call.1} parent=75 // pred_fallthru
          _
      $region76: #{tpu_custom_call.1} parent=5 // pred_fallthru
        _
    $region6: #{tpu_custom_call.1} parent=1 // loop_footer
      %s26 = sadd.s32 1, %s22
    $region7: #{tpu_custom_call.1} parent=1 // loop_footer_branch
      %21 = sbr.rel target = $region3
    $region8: #{tpu_custom_call.1} parent=1 // loop_exit
      _
    %703 = vsyncpa [#allocation3], 1
    %s704 = scalar_lea.sflag [#allocation3], 1
    %705 = vsyncpa %s704, 1
    %706 = vsyncpa [#allocation6], 1
    %s707 = scalar_lea.sflag [#allocation6], 1
    %708 = vsyncpa %s707, 1
    %709 = vsyncpa [#allocation4], 1
    %s710 = scalar_lea.sflag [#allocation4], 1
    %711 = vsyncpa %s710, 1

</llo_original>
